<compile_context>
chip_gen: v5e
topology: v5e:2x2
jax: 0.10.0
libtpu: 0.0.40
codegen_flags: <defaults>
</compile_context>

<pallas_src>
import math

import jax
import jax.numpy as jnp
from jax.experimental import pallas as pl
from jax.experimental.pallas import tpu as pltpu

# ---- module hyper-parameters (small, TPU-tile friendly) ---------------------
INDIM = 16
OUTDIM = 32
NUM_RELATIONS = 3
NUM_NODES = 128
NUM_BASES = 2
INPUT_LAYER = True
FEATURELESS = False
BIAS = True


# ---- deterministic parameter init (xavier_uniform like reset_parameters) ----
def _xavier_uniform(key, shape, dtype=jnp.float32):
    if len(shape) <= 2:
        fan_in, fan_out = shape[-1], shape[0]
    else:
        rf = 1
        for d in shape[2:]:
            rf *= d
        fan_in, fan_out = shape[1] * rf, shape[0] * rf
    bound = math.sqrt(6.0 / (fan_in + fan_out))
    return jax.random.uniform(key, shape, dtype, minval=-bound, maxval=bound)


def init_params(key):
    k1, k2, k3, k4 = jax.random.split(key, 4)
    return dict(
        weight_I_comp=_xavier_uniform(k1, (NUM_RELATIONS, NUM_BASES)),
        weight_F_comp=_xavier_uniform(k2, (NUM_RELATIONS, NUM_BASES)),
        weight_I=_xavier_uniform(k3, (NUM_BASES * NUM_NODES, OUTDIM)),
        weight_F=_xavier_uniform(k4, (NUM_BASES, INDIM, OUTDIM)),
        b=jnp.zeros((OUTDIM,), jnp.float32),  # nn.init.zeros_(self.b)
    )


# ---- Pallas kernel ----------------------------------------------------------
# Single invocation (grid=(1,)): everything fits comfortably in VMEM at this
# size.  Per-relation MXU dots accumulate straight into registers; no scratch.
def _rgcn_kernel(x_ref, a_ref, wfcat_ref, wib_ref, wfc_ref, wic_ref, b_ref,
                 out_ref):
    num_bases = wib_ref.shape[0]
    num_relations = wfc_ref.shape[0] // num_bases
    num_nodes = x_ref.shape[0]
    outdim = out_ref.shape[1]

    # One fused small-K matmul for ALL bases:
    #   X(N, indim) @ W_F_cat(indim, num_bases*outdim) -> (N, num_bases*outdim)
    xwf_cat = jnp.dot(x_ref[...], wfcat_ref[...],
                      preferred_element_type=jnp.float32)
    # Per-basis columns are lane slices of the single MXU result.
    xwf = [xwf_cat[:, b * outdim:(b + 1) * outdim] for b in range(num_bases)]
    wib = [wib_ref[b] for b in range(num_bases)]

    # Hoist all SMEM scalar reads out of the relation loop (read each once).
    wfc = [[wfc_ref[r * num_bases + b] for b in range(num_bases)]
           for r in range(num_relations)]
    wic = [[wic_ref[r * num_bases + b] for b in range(num_bases)]
           for r in range(num_relations)]

    acc = None
    for r in range(num_relations):
        # M_r = X @ W_F[r] + W_I[r]   (basis recombination: scalar*vreg VPU ops
        # that co-issue under the previous relation's MXU contraction).
        m_r = xwf[0] * wfc[r][0] + wib[0] * wic[r][0]
        for b in range(1, num_bases):
            m_r = m_r + xwf[b] * wfc[r][b] + wib[b] * wic[r][b]

        # A's relation-r column block starts at a 128-lane boundary -> free view.
        a_r = a_ref[:, pl.ds(r * num_nodes, num_nodes)].astype(jnp.float32)
        d = jnp.dot(a_r, m_r, preferred_element_type=jnp.float32)
        acc = d if acc is None else acc + d

    # Bias broadcast + add happens exactly once, in the single final store.
    out_ref[...] = (acc + b_ref[...]).astype(out_ref.dtype)


def graph_convolution_forward(X, A, params):
    N, indim = X.shape
    R, num_bases = params["weight_F_comp"].shape
    outdim = params["weight_F"].shape[-1]
    assert A.shape == (N, R * N)
    # Lane-aligned relation column blocks of A / sublane-aligned row blocks.
    assert N % 128 == 0, "kernel assumes num_nodes is a multiple of 128"

    # Glue reshapes (wrapper-side, pure layout plumbing):
    wi_bases = params["weight_I"].reshape(num_bases, N, outdim)
    # (num_bases, indim, outdim) -> (indim, num_bases*outdim): one MXU issue
    # for all bases' feature transforms.
    wf_cat = jnp.transpose(params["weight_F"], (1, 0, 2)).reshape(
        indim, num_bases * outdim)
    bias2d = params["b"].reshape(1, outdim)
    wfc_flat = params["weight_F_comp"].reshape(-1)   # 1D SMEM, no 2D padding
    wic_flat = params["weight_I_comp"].reshape(-1)
    # Adjacency is an exact 0/1 mask -> bf16 halves the dominant input DMA.
    a_bf16 = A.astype(jnp.bfloat16)

    grid_spec = pltpu.PrefetchScalarGridSpec(
        num_scalar_prefetch=0,
        grid=(1,),
        in_specs=[
            pl.BlockSpec((N, indim), lambda i: (0, 0)),                 # X
            pl.BlockSpec((N, R * N), lambda i: (0, 0)),                 # A (bf16)
            pl.BlockSpec((indim, num_bases * outdim), lambda i: (0, 0)),  # W_F cat
            pl.BlockSpec((num_bases, N, outdim), lambda i: (0, 0, 0)),  # W_I bases
            pl.BlockSpec(memory_space=pltpu.MemorySpace.SMEM),          # W_F_comp
            pl.BlockSpec(memory_space=pltpu.MemorySpace.SMEM),          # W_I_comp
            pl.BlockSpec((1, outdim), lambda i: (0, 0)),                # bias
        ],
        out_specs=pl.BlockSpec((N, outdim), lambda i: (0, 0)),
    )

    return pl.pallas_call(
        _rgcn_kernel,
        out_shape=jax.ShapeDtypeStruct((N, outdim), jnp.float32),
        grid_spec=grid_spec,
        compiler_params=pltpu.CompilerParams(
            dimension_semantics=("arbitrary",)),
    )(
        X.astype(jnp.float32), a_bf16,
        wf_cat, wi_bases,
        wfc_flat, wic_flat, bias2d,
    )


# ---- pure-JAX reference (mirrors the PyTorch forward) -----------------------
def graph_convolution_reference(X, A, params):
    R, num_bases = params["weight_F_comp"].shape
    N = X.shape[0]
    outdim = params["weight_F"].shape[-1]

    W_I = params["weight_I"].reshape(num_bases, N, outdim)
    W_I = jnp.einsum("rb,bij->rij", params["weight_I_comp"], W_I)
    W_I = W_I.reshape(R * N, outdim)
    AIW_I = A.astype(jnp.float32) @ W_I

    W_F = jnp.einsum("rb,bij->rij", params["weight_F_comp"], params["weight_F"])
    FW_F = jnp.einsum("ij,bjk->bik", X, W_F).reshape(R * N, outdim)
    AFW_F = A.astype(jnp.float32) @ FW_F

    return AIW_I + AFW_F + params["b"]


if __name__ == "__main__":
    key = jax.random.PRNGKey(0)
    kx, ka, kp = jax.random.split(key, 3)

    params = init_params(kp)
    X = jax.random.normal(kx, (NUM_NODES, INDIM), jnp.float32)
    # synthetic dense adjacency with ~10% edges per relation
    A = (jax.random.uniform(ka, (NUM_NODES, NUM_RELATIONS * NUM_NODES)) < 0.1
         ).astype(jnp.float32)

    out = graph_convolution_forward(X, A, params)
    out = jax.block_until_ready(out)

    ref = graph_convolution_reference(X, A, params)
    assert out.shape == (NUM_NODES, OUTDIM)
    assert jnp.allclose(out, ref, rtol=1e-4, atol=1e-4), \
        float(jnp.max(jnp.abs(out - ref)))

    print("KERNEL_OK")
</pallas_src>

<mosaic_0001>
module attributes {stable_mosaic.version = 11 : i64} {
  func.func @_rgcn_kernel(%arg0: i32, %arg1: memref<128x16xf32, #tpu.memory_space<vmem>>, %arg2: memref<128x384xbf16, #tpu.memory_space<vmem>>, %arg3: memref<16x64xf32, #tpu.memory_space<vmem>>, %arg4: memref<2x128x32xf32, #tpu.memory_space<vmem>>, %arg5: memref<6xf32, #tpu.memory_space<smem>>, %arg6: memref<6xf32, #tpu.memory_space<smem>>, %arg7: memref<1x32xf32, #tpu.memory_space<vmem>>, %arg8: memref<128x32xf32, #tpu.memory_space<vmem>>) attributes {dimension_semantics = [#tpu.dimension_semantics<arbitrary>], iteration_bounds = array<i64: 1>, scalar_prefetch = 0 : i64, scratch_operands = 0 : i64, tpu.core_type = #tpu.core_type<tc>, window_params = [{pipeline_mode = #tpu.pipeline_mode<synchronous>, transform_indices = @transform_0, window_bounds = array<i64: 128, 16>}, {pipeline_mode = #tpu.pipeline_mode<synchronous>, transform_indices = @transform_1, window_bounds = array<i64: 128, 384>}, {pipeline_mode = #tpu.pipeline_mode<synchronous>, transform_indices = @transform_2, window_bounds = array<i64: 16, 64>}, {pipeline_mode = #tpu.pipeline_mode<synchronous>, transform_indices = @transform_3, window_bounds = array<i64: 2, 128, 32>}, {transform_indices = @transform_4, window_bounds = array<i64: 6>}, {transform_indices = @transform_5, window_bounds = array<i64: 6>}, {pipeline_mode = #tpu.pipeline_mode<synchronous>, transform_indices = @transform_6, window_bounds = array<i64: 1, 32>}, {pipeline_mode = #tpu.pipeline_mode<synchronous>, transform_indices = @transform_7, window_bounds = array<i64: 128, 32>}]} {
    %c0 = arith.constant 0 : index
    %c0_0 = arith.constant 0 : index
    %0 = vector.load %arg1[%c0, %c0_0] : memref<128x16xf32, #tpu.memory_space<vmem>>, vector<128x16xf32>
    %c0_1 = arith.constant 0 : index
    %c0_2 = arith.constant 0 : index
    %1 = vector.load %arg3[%c0_1, %c0_2] : memref<16x64xf32, #tpu.memory_space<vmem>>, vector<16x64xf32>
    %cst = arith.constant dense<0.000000e+00> : vector<128x64xf32>
    %2 = tpu.matmul %0, %1, %cst {dimension_numbers = #tpu.dot_dimension_numbers<[1], [0], [0], [1], [0, 0, 1, 1], [], []>} : vector<128x16xf32>, vector<16x64xf32>, vector<128x64xf32> -> vector<128x64xf32>
    %3 = vector.extract_strided_slice %2 {offsets = [0, 0], sizes = [128, 32], strides = [1, 1]} : vector<128x64xf32> to vector<128x32xf32>
    %4 = vector.extract_strided_slice %2 {offsets = [0, 32], sizes = [128, 32], strides = [1, 1]} : vector<128x64xf32> to vector<128x32xf32>
    %c0_3 = arith.constant 0 : index
    %c0_4 = arith.constant 0 : index
    %c0_5 = arith.constant 0 : index
    %5 = vector.load %arg4[%c0_3, %c0_4, %c0_5] : memref<2x128x32xf32, #tpu.memory_space<vmem>>, vector<1x128x32xf32>
    %6 = vector.shape_cast %5 : vector<1x128x32xf32> to vector<128x32xf32>
    %c1 = arith.constant 1 : index
    %c0_6 = arith.constant 0 : index
    %c0_7 = arith.constant 0 : index
    %7 = vector.load %arg4[%c1, %c0_6, %c0_7] : memref<2x128x32xf32, #tpu.memory_space<vmem>>, vector<1x128x32xf32>
    %8 = vector.shape_cast %7 : vector<1x128x32xf32> to vector<128x32xf32>
    %c0_8 = arith.constant 0 : index
    %9 = memref.load %arg5[%c0_8] : memref<6xf32, #tpu.memory_space<smem>>
    %c1_9 = arith.constant 1 : index
    %10 = memref.load %arg5[%c1_9] : memref<6xf32, #tpu.memory_space<smem>>
    %c2 = arith.constant 2 : index
    %11 = memref.load %arg5[%c2] : memref<6xf32, #tpu.memory_space<smem>>
    %c3 = arith.constant 3 : index
    %12 = memref.load %arg5[%c3] : memref<6xf32, #tpu.memory_space<smem>>
    %c4 = arith.constant 4 : index
    %13 = memref.load %arg5[%c4] : memref<6xf32, #tpu.memory_space<smem>>
    %c5 = arith.constant 5 : index
    %14 = memref.load %arg5[%c5] : memref<6xf32, #tpu.memory_space<smem>>
    %c0_10 = arith.constant 0 : index
    %15 = memref.load %arg6[%c0_10] : memref<6xf32, #tpu.memory_space<smem>>
    %c1_11 = arith.constant 1 : index
    %16 = memref.load %arg6[%c1_11] : memref<6xf32, #tpu.memory_space<smem>>
    %c2_12 = arith.constant 2 : index
    %17 = memref.load %arg6[%c2_12] : memref<6xf32, #tpu.memory_space<smem>>
    %c3_13 = arith.constant 3 : index
    %18 = memref.load %arg6[%c3_13] : memref<6xf32, #tpu.memory_space<smem>>
    %c4_14 = arith.constant 4 : index
    %19 = memref.load %arg6[%c4_14] : memref<6xf32, #tpu.memory_space<smem>>
    %c5_15 = arith.constant 5 : index
    %20 = memref.load %arg6[%c5_15] : memref<6xf32, #tpu.memory_space<smem>>
    %21 = vector.broadcast %9 : f32 to vector<128x32xf32>
    %22 = arith.mulf %3, %21 : vector<128x32xf32>
    %23 = vector.broadcast %15 : f32 to vector<128x32xf32>
    %24 = arith.mulf %6, %23 : vector<128x32xf32>
    %25 = arith.addf %22, %24 : vector<128x32xf32>
    %26 = vector.broadcast %10 : f32 to vector<128x32xf32>
    %27 = arith.mulf %4, %26 : vector<128x32xf32>
    %28 = arith.addf %25, %27 : vector<128x32xf32>
    %29 = vector.broadcast %16 : f32 to vector<128x32xf32>
    %30 = arith.mulf %8, %29 : vector<128x32xf32>
    %31 = arith.addf %28, %30 : vector<128x32xf32>
    %c0_16 = arith.constant 0 : index
    %c0_17 = arith.constant 0 : index
    %32 = vector.load %arg2[%c0_16, %c0_17] : memref<128x384xbf16, #tpu.memory_space<vmem>>, vector<128x128xbf16>
    %33 = arith.extf %32 : vector<128x128xbf16> to vector<128x128xf32>
    %cst_18 = arith.constant dense<0.000000e+00> : vector<128x32xf32>
    %34 = tpu.matmul %33, %31, %cst_18 {dimension_numbers = #tpu.dot_dimension_numbers<[1], [0], [0], [1], [0, 0, 1, 1], [], []>} : vector<128x128xf32>, vector<128x32xf32>, vector<128x32xf32> -> vector<128x32xf32>
    %35 = vector.broadcast %11 : f32 to vector<128x32xf32>
    %36 = arith.mulf %3, %35 : vector<128x32xf32>
    %37 = vector.broadcast %17 : f32 to vector<128x32xf32>
    %38 = arith.mulf %6, %37 : vector<128x32xf32>
    %39 = arith.addf %36, %38 : vector<128x32xf32>
    %40 = vector.broadcast %12 : f32 to vector<128x32xf32>
    %41 = arith.mulf %4, %40 : vector<128x32xf32>
    %42 = arith.addf %39, %41 : vector<128x32xf32>
    %43 = vector.broadcast %18 : f32 to vector<128x32xf32>
    %44 = arith.mulf %8, %43 : vector<128x32xf32>
    %45 = arith.addf %42, %44 : vector<128x32xf32>
    %c0_19 = arith.constant 0 : index
    %c128 = arith.constant 128 : index
    %46 = vector.load %arg2[%c0_19, %c128] : memref<128x384xbf16, #tpu.memory_space<vmem>>, vector<128x128xbf16>
    %47 = arith.extf %46 : vector<128x128xbf16> to vector<128x128xf32>
    %cst_20 = arith.constant dense<0.000000e+00> : vector<128x32xf32>
    %48 = tpu.matmul %47, %45, %cst_20 {dimension_numbers = #tpu.dot_dimension_numbers<[1], [0], [0], [1], [0, 0, 1, 1], [], []>} : vector<128x128xf32>, vector<128x32xf32>, vector<128x32xf32> -> vector<128x32xf32>
    %49 = arith.addf %34, %48 : vector<128x32xf32>
    %50 = vector.broadcast %13 : f32 to vector<128x32xf32>
    %51 = arith.mulf %3, %50 : vector<128x32xf32>
    %52 = vector.broadcast %19 : f32 to vector<128x32xf32>
    %53 = arith.mulf %6, %52 : vector<128x32xf32>
    %54 = arith.addf %51, %53 : vector<128x32xf32>
    %55 = vector.broadcast %14 : f32 to vector<128x32xf32>
    %56 = arith.mulf %4, %55 : vector<128x32xf32>
    %57 = arith.addf %54, %56 : vector<128x32xf32>
    %58 = vector.broadcast %20 : f32 to vector<128x32xf32>
    %59 = arith.mulf %8, %58 : vector<128x32xf32>
    %60 = arith.addf %57, %59 : vector<128x32xf32>
    %c0_21 = arith.constant 0 : index
    %c256 = arith.constant 256 : index
    %61 = vector.load %arg2[%c0_21, %c256] : memref<128x384xbf16, #tpu.memory_space<vmem>>, vector<128x128xbf16>
    %62 = arith.extf %61 : vector<128x128xbf16> to vector<128x128xf32>
    %cst_22 = arith.constant dense<0.000000e+00> : vector<128x32xf32>
    %63 = tpu.matmul %62, %60, %cst_22 {dimension_numbers = #tpu.dot_dimension_numbers<[1], [0], [0], [1], [0, 0, 1, 1], [], []>} : vector<128x128xf32>, vector<128x32xf32>, vector<128x32xf32> -> vector<128x32xf32>
    %64 = arith.addf %49, %63 : vector<128x32xf32>
    %c0_23 = arith.constant 0 : index
    %c0_24 = arith.constant 0 : index
    %65 = vector.load %arg7[%c0_23, %c0_24] : memref<1x32xf32, #tpu.memory_space<vmem>>, vector<1x32xf32>
    %66 = vector.broadcast %65 : vector<1x32xf32> to vector<128x32xf32>
    %67 = arith.addf %64, %66 : vector<128x32xf32>
    %c0_25 = arith.constant 0 : index
    %c0_26 = arith.constant 0 : index
    %68 = vector.load %arg8[%c0_25, %c0_26] : memref<128x32xf32, #tpu.memory_space<vmem>>, vector<128x32xf32>
    tpu.vector_store %arg8[%c0_25, %c0_26], %67 {strides = array<i32>} : memref<128x32xf32, #tpu.memory_space<vmem>>, vector<128x32xf32>,
    return
  }
  func.func @transform_0(%arg0: i32) -> (i32, i32) {
    %c0_i32 = arith.constant 0 : i32
    %c0_i32_0 = arith.constant 0 : i32
    %c0_i32_1 = arith.constant 0 : i32
    return %c0_i32, %c0_i32_0 : i32, i32
  }
  func.func @transform_1(%arg0: i32) -> (i32, i32) {
    %c0_i32 = arith.constant 0 : i32
    %c0_i32_0 = arith.constant 0 : i32
    %c0_i32_1 = arith.constant 0 : i32
    return %c0_i32, %c0_i32_0 : i32, i32
  }
  func.func @transform_2(%arg0: i32) -> (i32, i32) {
    %c0_i32 = arith.constant 0 : i32
    %c0_i32_0 = arith.constant 0 : i32
    %c0_i32_1 = arith.constant 0 : i32
    return %c0_i32, %c0_i32_0 : i32, i32
  }
  func.func @transform_3(%arg0: i32) -> (i32, i32, i32) {
    %c0_i32 = arith.constant 0 : i32
    %c0_i32_0 = arith.constant 0 : i32
    %c0_i32_1 = arith.constant 0 : i32
    %c0_i32_2 = arith.constant 0 : i32
    return %c0_i32, %c0_i32_0, %c0_i32_1 : i32, i32, i32
  }
  func.func @transform_4(%arg0: i32) -> i32 {
    %c0_i32 = arith.constant 0 : i32
    %c0_i32_0 = arith.constant 0 : i32
    return %c0_i32 : i32
  }
  func.func @transform_5(%arg0: i32) -> i32 {
    %c0_i32 = arith.constant 0 : i32
    %c0_i32_0 = arith.constant 0 : i32
    return %c0_i32 : i32
  }
  func.func @transform_6(%arg0: i32) -> (i32, i32) {
    %c0_i32 = arith.constant 0 : i32
    %c0_i32_0 = arith.constant 0 : i32
    %c0_i32_1 = arith.constant 0 : i32
    return %c0_i32, %c0_i32_0 : i32, i32
  }
  func.func @transform_7(%arg0: i32) -> (i32, i32) {
    %c0_i32 = arith.constant 0 : i32
    %c0_i32_0 = arith.constant 0 : i32
    %c0_i32_1 = arith.constant 0 : i32
    return %c0_i32, %c0_i32_0 : i32, i32
  }
}

</mosaic_0001>

<llo_original>
// kernel: tpu_custom_call.1
$region0: #{tpu_custom_call.1}
  #allocation0 [shape = 'u32[]', space=smem, size = 0x4, offset = 0x4, fixed_abs, tag = 'smem constant byte address 0x4 - core index']
  #allocation1 [shape = 'u32[72,128]{1,0:T(1,128)}', space=vmem, size = 0x9000, scoped, tag = 'internal scratch']
  %s0 = inlined_call_operand.vmem [shape: f32[128,16], index: 0, kind: input, shape index: {}]
  %s1 = inlined_call_operand.vmem [shape: bf16[128,384], index: 1, kind: input, shape index: {}]
  %s2 = inlined_call_operand.vmem [shape: f32[16,64], index: 2, kind: input, shape index: {}]
  %s3 = inlined_call_operand.vmem [shape: f32[2,128,32], index: 3, kind: input, shape index: {}]
  %s4 = inlined_call_operand.vmem [shape: f32[6], index: 4, kind: input, shape index: {}]
  %s5 = inlined_call_operand.vmem [shape: f32[6], index: 5, kind: input, shape index: {}]
  %s6 = inlined_call_operand.vmem [shape: f32[1,32], index: 6, kind: input, shape index: {}]
  %s7 = inlined_call_operand.vmem [shape: f32[128,32], index: 7, kind: output, shape index: {}]
  %s8 = sld [smem:[#allocation0]]
  $region46: #{tpu_custom_call.1} parent=0
    _
  %s10 = ssub.s32 1, %s8
  %s11 = scalar_select 0, %s10, %s8
  $region1: #{tpu_custom_call.1} parent=0
    #allocation2 [shape = 'u8[512]{0}', space=smem, size = 0x200, scoped, tag = 'input window, operand 4, single buffered']
    #allocation3 [shape = 's32[1]{0}', space=sflag, size = 0x4, scoped, tag = 'scoped memory for tpu_custom_call.1']
    #allocation4 [shape = 'u8[512]{0}', space=smem, size = 0x200, scoped, tag = 'input window, operand 5, single buffered']
    #allocation5 [shape = 's32[1]{0}', space=sflag, size = 0x4, scoped, tag = 'scoped memory for tpu_custom_call.1']
    %12 = vsyncpa [#allocation3], 0
    %13 = vsyncpa [#allocation5], 0
    // Predicated region
    $region2: #{tpu_custom_call.1} parent=1 // pred_check
      _
    $region3: #{tpu_custom_call.1} parent=1 // pred_check_branch
      %15 = sbr.rel (0) target = $region5
    $region4: #{tpu_custom_call.1} parent=1 // pred_region
      _
    $region5: #{tpu_custom_call.1} parent=1 // pred_fallthru
      _
    // Predicated region
    $region6: #{tpu_custom_call.1} parent=1 // pred_check
      _
    $region7: #{tpu_custom_call.1} parent=1 // pred_check_branch
      %17 = sbr.rel (0) target = $region9
    $region8: #{tpu_custom_call.1} parent=1 // pred_region
      _
    $region9: #{tpu_custom_call.1} parent=1 // pred_fallthru
      _
    // Predicated region
    $region10: #{tpu_custom_call.1} parent=1 // pred_check
      _
    $region11: #{tpu_custom_call.1} parent=1 // pred_check_branch
      %19 = sbr.rel (0) target = $region13
    $region12: #{tpu_custom_call.1} parent=1 // pred_region
      _
    $region13: #{tpu_custom_call.1} parent=1 // pred_fallthru
      _
    // Predicated region
    $region14: #{tpu_custom_call.1} parent=1 // pred_check
      _
    $region15: #{tpu_custom_call.1} parent=1 // pred_check_branch
      %21 = sbr.rel (0) target = $region17
    $region16: #{tpu_custom_call.1} parent=1 // pred_region
      _
    $region17: #{tpu_custom_call.1} parent=1 // pred_fallthru
      _
    // Predicated region
    $region18: #{tpu_custom_call.1} parent=1 // pred_check
      _
    $region19: #{tpu_custom_call.1} parent=1 // pred_check_branch
      %23 = sbr.rel (0) target = $region21
    $region20: #{tpu_custom_call.1} parent=1 // pred_region
      %25 = vsyncadd [#allocation3], 0
      %s27 = sshll.u32 %s4, 4
      %s28 = int_to_ptr.vmem [resolvable:$true] %s27
      %30 = dma.vmem_to_smem %s28, 16, [#allocation2], [#allocation3]
    $region21: #{tpu_custom_call.1} parent=1 // pred_fallthru
      _
    // Predicated region
    $region22: #{tpu_custom_call.1} parent=1 // pred_check
      _
    $region23: #{tpu_custom_call.1} parent=1 // pred_check_branch
      %32 = sbr.rel (0) target = $region25
    $region24: #{tpu_custom_call.1} parent=1 // pred_region
      %34 = vsyncadd [#allocation5], 0
      %s36 = sshll.u32 %s5, 4
      %s37 = int_to_ptr.vmem [resolvable:$true] %s36
      %39 = dma.vmem_to_smem %s37, 16, [#allocation4], [#allocation5]
    $region25: #{tpu_custom_call.1} parent=1 // pred_fallthru
      _
    // Predicated region
    $region26: #{tpu_custom_call.1} parent=1 // pred_check
      _
    $region27: #{tpu_custom_call.1} parent=1 // pred_check_branch
      %41 = sbr.rel (0) target = $region29
    $region28: #{tpu_custom_call.1} parent=1 // pred_region
      _
    $region29: #{tpu_custom_call.1} parent=1 // pred_fallthru
      _
    // Predicated region
    $region30: #{tpu_custom_call.1} parent=1 // pred_check
      _
    $region31: #{tpu_custom_call.1} parent=1 // pred_check_branch
      %43 = sbr.rel (0) target = $region33
    $region32: #{tpu_custom_call.1} parent=1 // pred_region
      %45 = dma.done [#allocation3], 16
    $region33: #{tpu_custom_call.1} parent=1 // pred_fallthru
      _
    // Predicated region
    $region34: #{tpu_custom_call.1} parent=1 // pred_check
      _
    $region35: #{tpu_custom_call.1} parent=1 // pred_check_branch
      %47 = sbr.rel (0) target = $region37
    $region36: #{tpu_custom_call.1} parent=1 // pred_region
      %49 = dma.done [#allocation5], 16
    $region37: #{tpu_custom_call.1} parent=1 // pred_fallthru
      _
    %50 = sfence
    %v51 = vld [vmem:[%s0] sm:$0xff]
    %v52 = vld [vmem:[%s0 + $0x8] sm:$0xff]
    %v53 = vld [vmem:[%s0 + $0x10] sm:$0xff]
    %v54 = vld [vmem:[%s0 + $0x18] sm:$0xff]
    %v55 = vld [vmem:[%s0 + $0x20] sm:$0xff]
    %v56 = vld [vmem:[%s0 + $0x28] sm:$0xff]
    %v57 = vld [vmem:[%s0 + $0x30] sm:$0xff]
    %v58 = vld [vmem:[%s0 + $0x38] sm:$0xff]
    %v59 = vld [vmem:[%s0 + $0x40] sm:$0xff]
    %v60 = vld [vmem:[%s0 + $0x48] sm:$0xff]
    %v61 = vld [vmem:[%s0 + $0x50] sm:$0xff]
    %v62 = vld [vmem:[%s0 + $0x58] sm:$0xff]
    %v63 = vld [vmem:[%s0 + $0x60] sm:$0xff]
    %v64 = vld [vmem:[%s0 + $0x68] sm:$0xff]
    %v65 = vld [vmem:[%s0 + $0x70] sm:$0xff]
    %v66 = vld [vmem:[%s0 + $0x78] sm:$0xff]
    %v67 = vld [vmem:[%s2] sm:$0xff]
    %v68 = vld [vmem:[%s2 + $0x8] sm:$0xff]
    %vm69 = vcmask 130048
    %v71 = vsel %vm69, %v51, 0
    %v74 = vsel %vm69, %v52, 0
    %v77 = vsel %vm69, %v53, 0
    %v80 = vsel %vm69, %v54, 0
    %v83 = vsel %vm69, %v55, 0
    %v86 = vsel %vm69, %v56, 0
    %v89 = vsel %vm69, %v57, 0
    %v92 = vsel %vm69, %v58, 0
    %v95 = vsel %vm69, %v59, 0
    %v98 = vsel %vm69, %v60, 0
    %v101 = vsel %vm69, %v61, 0
    %v104 = vsel %vm69, %v62, 0
    %v107 = vsel %vm69, %v63, 0
    %v110 = vsel %vm69, %v64, 0
    %v113 = vsel %vm69, %v65, 0
    %v116 = vsel %vm69, %v66, 0
    %118 = vmatpush.msra.mxu0 0.0
    %119 = vmatpush.msra.mxu0 0.0
    %120 = vmatpush.msra.mxu0 0.0
    %121 = vmatpush.msra.mxu0 0.0
    %122 = vmatpush.msra.mxu0 0.0
    %123 = vmatpush.msra.mxu0 0.0
    %124 = vmatpush.msra.mxu0 0.0
    %125 = vmatpush.msra.mxu0 0.0
    %126 = vmatpush.msra.mxu0 0.0
    %127 = vmatpush.msra.mxu0 0.0
    %128 = vmatpush.msra.mxu0 0.0
    %129 = vmatpush.msra.mxu0 0.0
    %130 = vmatpush.msra.mxu0 0.0
    %131 = vmatpush.msra.mxu0 0.0
    %132 = vmatpush.msra.mxu0 %v68
    %133 = vmatpush.msra.mxu0 %v67
    %134 = vmatmul.f32.gmra.mxu0 %v71
    %v135 = vpop.f32.mrf.mxu0
    %v136 = vadd.f32 0.0, %v135
    %137 = vmatmul.f32.gmra.mxu0 %v74
    %v138 = vpop.f32.mrf.mxu0
    %v139 = vadd.f32 0.0, %v138
    %140 = vmatmul.f32.gmra.mxu0 %v77
    %v141 = vpop.f32.mrf.mxu0
    %v142 = vadd.f32 0.0, %v141
    %143 = vmatmul.f32.gmra.mxu0 %v80
    %v144 = vpop.f32.mrf.mxu0
    %v145 = vadd.f32 0.0, %v144
    %146 = vmatmul.f32.gmra.mxu0 %v83
    %v147 = vpop.f32.mrf.mxu0
    %v148 = vadd.f32 0.0, %v147
    %149 = vmatmul.f32.gmra.mxu0 %v86
    %v150 = vpop.f32.mrf.mxu0
    %v151 = vadd.f32 0.0, %v150
    %152 = vmatmul.f32.gmra.mxu0 %v89
    %v153 = vpop.f32.mrf.mxu0
    %v154 = vadd.f32 0.0, %v153
    %155 = vmatmul.f32.gmra.mxu0 %v92
    %v156 = vpop.f32.mrf.mxu0
    %v157 = vadd.f32 0.0, %v156
    %158 = vmatmul.f32.gmra.mxu0 %v95
    %v159 = vpop.f32.mrf.mxu0
    %v160 = vadd.f32 0.0, %v159
    %161 = vmatmul.f32.gmra.mxu0 %v98
    %v162 = vpop.f32.mrf.mxu0
    %v163 = vadd.f32 0.0, %v162
    %164 = vmatmul.f32.gmra.mxu0 %v101
    %v165 = vpop.f32.mrf.mxu0
    %v166 = vadd.f32 0.0, %v165
    %167 = vmatmul.f32.gmra.mxu0 %v104
    %v168 = vpop.f32.mrf.mxu0
    %v169 = vadd.f32 0.0, %v168
    %170 = vmatmul.f32.gmra.mxu0 %v107
    %v171 = vpop.f32.mrf.mxu0
    %v172 = vadd.f32 0.0, %v171
    %173 = vmatmul.f32.gmra.mxu0 %v110
    %v174 = vpop.f32.mrf.mxu0
    %v175 = vadd.f32 0.0, %v174
    %176 = vmatmul.f32.gmra.mxu0 %v113
    %v177 = vpop.f32.mrf.mxu0
    %v178 = vadd.f32 0.0, %v177
    %179 = vmatmul.f32.gmra.mxu0 %v116
    %v180 = vpop.f32.mrf.mxu0
    %v181 = vadd.f32 0.0, %v180
    %182 = vdwg.mxu0
    %v183 = vld [vmem:[%s3] sm:$0xff]
    %v184 = vld [vmem:[%s3 + $0x8] sm:$0xff]
    %v185 = vld [vmem:[%s3 + $0x10] sm:$0xff]
    %v186 = vld [vmem:[%s3 + $0x18] sm:$0xff]
    %v187 = vld [vmem:[%s3 + $0x20] sm:$0xff]
    %v188 = vld [vmem:[%s3 + $0x28] sm:$0xff]
    %v189 = vld [vmem:[%s3 + $0x30] sm:$0xff]
    %v190 = vld [vmem:[%s3 + $0x38] sm:$0xff]
    %v191 = vld [vmem:[%s3 + $0x40] sm:$0xff]
    %v192 = vld [vmem:[%s3 + $0x48] sm:$0xff]
    %v193 = vld [vmem:[%s3 + $0x50] sm:$0xff]
    %v194 = vld [vmem:[%s3 + $0x58] sm:$0xff]
    %v195 = vld [vmem:[%s3 + $0x60] sm:$0xff]
    %v196 = vld [vmem:[%s3 + $0x68] sm:$0xff]
    %v197 = vld [vmem:[%s3 + $0x70] sm:$0xff]
    %v198 = vld [vmem:[%s3 + $0x78] sm:$0xff]
    %s199 = scalar_lea.vmem %s3, 128
    %v200 = vld [vmem:[%s199] sm:$0xff]
    %v201 = vld [vmem:[%s199 + $0x8] sm:$0xff]
    %v202 = vld [vmem:[%s199 + $0x10] sm:$0xff]
    %v203 = vld [vmem:[%s199 + $0x18] sm:$0xff]
    %v204 = vld [vmem:[%s199 + $0x20] sm:$0xff]
    %v205 = vld [vmem:[%s199 + $0x28] sm:$0xff]
    %v206 = vld [vmem:[%s199 + $0x30] sm:$0xff]
    %v207 = vld [vmem:[%s199 + $0x38] sm:$0xff]
    %v208 = vld [vmem:[%s199 + $0x40] sm:$0xff]
    %v209 = vld [vmem:[%s199 + $0x48] sm:$0xff]
    %v210 = vld [vmem:[%s199 + $0x50] sm:$0xff]
    %v211 = vld [vmem:[%s199 + $0x58] sm:$0xff]
    %v212 = vld [vmem:[%s199 + $0x60] sm:$0xff]
    %v213 = vld [vmem:[%s199 + $0x68] sm:$0xff]
    %v214 = vld [vmem:[%s199 + $0x70] sm:$0xff]
    %v215 = vld [vmem:[%s199 + $0x78] sm:$0xff]
    %s216 = sld [smem:[#allocation2]]
    %s217 = sld [smem:[#allocation2 + $0x1]]
    %s218 = sld [smem:[#allocation2 + $0x2]]
    %s219 = sld [smem:[#allocation2 + $0x3]]
    %s220 = sld [smem:[#allocation2 + $0x4]]
    %s221 = sld [smem:[#allocation2 + $0x5]]
    %s222 = sld [smem:[#allocation4]]
    %s223 = sld [smem:[#allocation4 + $0x1]]
    %s224 = sld [smem:[#allocation4 + $0x2]]
    %s225 = sld [smem:[#allocation4 + $0x3]]
    %s226 = sld [smem:[#allocation4 + $0x4]]
    %s227 = sld [smem:[#allocation4 + $0x5]]
    %v228 = vstv %s216
    %v229 = vmul.f32 %v136, %v228
    %v230 = vmul.f32 %v139, %v228
    %v231 = vmul.f32 %v142, %v228
    %v232 = vmul.f32 %v145, %v228
    %v233 = vmul.f32 %v148, %v228
    %v234 = vmul.f32 %v151, %v228
    %v235 = vmul.f32 %v154, %v228
    %v236 = vmul.f32 %v157, %v228
    %v237 = vmul.f32 %v160, %v228
    %v238 = vmul.f32 %v163, %v228
    %v239 = vmul.f32 %v166, %v228
    %v240 = vmul.f32 %v169, %v228
    %v241 = vmul.f32 %v172, %v228
    %v242 = vmul.f32 %v175, %v228
    %v243 = vmul.f32 %v178, %v228
    %v244 = vmul.f32 %v181, %v228
    %v245 = vstv %s222
    %v246 = vmul.f32 %v183, %v245
    %v247 = vmul.f32 %v184, %v245
    %v248 = vmul.f32 %v185, %v245
    %v249 = vmul.f32 %v186, %v245
    %v250 = vmul.f32 %v187, %v245
    %v251 = vmul.f32 %v188, %v245
    %v252 = vmul.f32 %v189, %v245
    %v253 = vmul.f32 %v190, %v245
    %v254 = vmul.f32 %v191, %v245
    %v255 = vmul.f32 %v192, %v245
    %v256 = vmul.f32 %v193, %v245
    %v257 = vmul.f32 %v194, %v245
    %v258 = vmul.f32 %v195, %v245
    %v259 = vmul.f32 %v196, %v245
    %v260 = vmul.f32 %v197, %v245
    %v261 = vmul.f32 %v198, %v245
    %v262 = vadd.f32 %v229, %v246
    %v263 = vadd.f32 %v230, %v247
    %v264 = vadd.f32 %v231, %v248
    %v265 = vadd.f32 %v232, %v249
    %v266 = vadd.f32 %v233, %v250
    %v267 = vadd.f32 %v234, %v251
    %v268 = vadd.f32 %v235, %v252
    %v269 = vadd.f32 %v236, %v253
    %v270 = vadd.f32 %v237, %v254
    %v271 = vadd.f32 %v238, %v255
    %v272 = vadd.f32 %v239, %v256
    %v273 = vadd.f32 %v240, %v257
    %v274 = vadd.f32 %v241, %v258
    %v275 = vadd.f32 %v242, %v259
    %v276 = vadd.f32 %v243, %v260
    %v277 = vadd.f32 %v244, %v261
    %v278 = vstv %s217
    %v279 = vmul.f32 %v136, %v278
    %v280 = vmul.f32 %v139, %v278
    %v281 = vmul.f32 %v142, %v278
    %v282 = vmul.f32 %v145, %v278
    %v283 = vmul.f32 %v148, %v278
    %v284 = vmul.f32 %v151, %v278
    %v285 = vmul.f32 %v154, %v278
    %v286 = vmul.f32 %v157, %v278
    %v287 = vmul.f32 %v160, %v278
    %v288 = vmul.f32 %v163, %v278
    %v289 = vmul.f32 %v166, %v278
    %v290 = vmul.f32 %v169, %v278
    %v291 = vmul.f32 %v172, %v278
    %v292 = vmul.f32 %v175, %v278
    %v293 = vmul.f32 %v178, %v278
    %v294 = vmul.f32 %v181, %v278
    %311 = vrot.lane.b32.xlu0 %v279, 96
    %v312 = vpop.permute.xlu0 %311
    %313 = vrot.lane.b32.xlu0 %v280, 96
    %v314 = vpop.permute.xlu0 %313
    %315 = vrot.lane.b32.xlu0 %v281, 96
    %v316 = vpop.permute.xlu0 %315
    %317 = vrot.lane.b32.xlu0 %v282, 96
    %v318 = vpop.permute.xlu0 %317
    %319 = vrot.lane.b32.xlu0 %v283, 96
    %v320 = vpop.permute.xlu0 %319
    %321 = vrot.lane.b32.xlu0 %v284, 96
    %v322 = vpop.permute.xlu0 %321
    %323 = vrot.lane.b32.xlu0 %v285, 96
    %v324 = vpop.permute.xlu0 %323
    %325 = vrot.lane.b32.xlu0 %v286, 96
    %v326 = vpop.permute.xlu0 %325
    %327 = vrot.lane.b32.xlu0 %v287, 96
    %v328 = vpop.permute.xlu0 %327
    %329 = vrot.lane.b32.xlu0 %v288, 96
    %v330 = vpop.permute.xlu0 %329
    %331 = vrot.lane.b32.xlu0 %v289, 96
    %v332 = vpop.permute.xlu0 %331
    %333 = vrot.lane.b32.xlu0 %v290, 96
    %v334 = vpop.permute.xlu0 %333
    %335 = vrot.lane.b32.xlu0 %v291, 96
    %v336 = vpop.permute.xlu0 %335
    %337 = vrot.lane.b32.xlu0 %v292, 96
    %v338 = vpop.permute.xlu0 %337
    %339 = vrot.lane.b32.xlu0 %v293, 96
    %v340 = vpop.permute.xlu0 %339
    %341 = vrot.lane.b32.xlu0 %v294, 96
    %v342 = vpop.permute.xlu0 %341
    %v359 = vadd.f32 %v262, %v312
    %v360 = vadd.f32 %v263, %v314
    %v361 = vadd.f32 %v264, %v316
    %v362 = vadd.f32 %v265, %v318
    %v363 = vadd.f32 %v266, %v320
    %v364 = vadd.f32 %v267, %v322
    %v365 = vadd.f32 %v268, %v324
    %v366 = vadd.f32 %v269, %v326
    %v367 = vadd.f32 %v270, %v328
    %v368 = vadd.f32 %v271, %v330
    %v369 = vadd.f32 %v272, %v332
    %v370 = vadd.f32 %v273, %v334
    %v371 = vadd.f32 %v274, %v336
    %v372 = vadd.f32 %v275, %v338
    %v373 = vadd.f32 %v276, %v340
    %v374 = vadd.f32 %v277, %v342
    %v375 = vstv %s223
    %v376 = vmul.f32 %v200, %v375
    %v377 = vmul.f32 %v201, %v375
    %v378 = vmul.f32 %v202, %v375
    %v379 = vmul.f32 %v203, %v375
    %v380 = vmul.f32 %v204, %v375
    %v381 = vmul.f32 %v205, %v375
    %v382 = vmul.f32 %v206, %v375
    %v383 = vmul.f32 %v207, %v375
    %v384 = vmul.f32 %v208, %v375
    %v385 = vmul.f32 %v209, %v375
    %v386 = vmul.f32 %v210, %v375
    %v387 = vmul.f32 %v211, %v375
    %v388 = vmul.f32 %v212, %v375
    %v389 = vmul.f32 %v213, %v375
    %v390 = vmul.f32 %v214, %v375
    %v391 = vmul.f32 %v215, %v375
    %v392 = vadd.f32 %v359, %v376
    %v393 = vadd.f32 %v360, %v377
    %v394 = vadd.f32 %v361, %v378
    %v395 = vadd.f32 %v362, %v379
    %v396 = vadd.f32 %v363, %v380
    %v397 = vadd.f32 %v364, %v381
    %v398 = vadd.f32 %v365, %v382
    %v399 = vadd.f32 %v366, %v383
    %v400 = vadd.f32 %v367, %v384
    %v401 = vadd.f32 %v368, %v385
    %v402 = vadd.f32 %v369, %v386
    %v403 = vadd.f32 %v370, %v387
    %v404 = vadd.f32 %v371, %v388
    %v405 = vadd.f32 %v372, %v389
    %v406 = vadd.f32 %v373, %v390
    %v407 = vadd.f32 %v374, %v391
    %v408 = vld [vmem:[%s1] sm:$0xf]
    %v409 = vld [vmem:[%s1 + $0xc] sm:$0xf]
    %v410 = vld [vmem:[%s1 + $0x18] sm:$0xf]
    %v411 = vld [vmem:[%s1 + $0x24] sm:$0xf]
    %v412 = vld [vmem:[%s1 + $0x30] sm:$0xf]
    %v413 = vld [vmem:[%s1 + $0x3c] sm:$0xf]
    %v414 = vld [vmem:[%s1 + $0x48] sm:$0xf]
    %v415 = vld [vmem:[%s1 + $0x54] sm:$0xf]
    %v416 = vld [vmem:[%s1 + $0x60] sm:$0xf]
    %v417 = vld [vmem:[%s1 + $0x6c] sm:$0xf]
    %v418 = vld [vmem:[%s1 + $0x78] sm:$0xf]
    %v419 = vld [vmem:[%s1 + $0x84] sm:$0xf]
    %v420 = vld [vmem:[%s1 + $0x90] sm:$0xf]
    %v421 = vld [vmem:[%s1 + $0x9c] sm:$0xf]
    %v422 = vld [vmem:[%s1 + $0xa8] sm:$0xf]
    %v423 = vld [vmem:[%s1 + $0xb4] sm:$0xf]
    %v424 = vunpack.c.l.bf16 %v408
    %v425 = vunpack.c.l.bf16 %v409
    %v426 = vunpack.c.l.bf16 %v410
    %v427 = vunpack.c.l.bf16 %v411
    %v428 = vunpack.c.l.bf16 %v412
    %v429 = vunpack.c.l.bf16 %v413
    %v430 = vunpack.c.l.bf16 %v414
    %v431 = vunpack.c.l.bf16 %v415
    %v432 = vunpack.c.l.bf16 %v416
    %v433 = vunpack.c.l.bf16 %v417
    %v434 = vunpack.c.l.bf16 %v418
    %v435 = vunpack.c.l.bf16 %v419
    %v436 = vunpack.c.l.bf16 %v420
    %v437 = vunpack.c.l.bf16 %v421
    %v438 = vunpack.c.l.bf16 %v422
    %v439 = vunpack.c.l.bf16 %v423
    %v440 = vstv %s218
    %v441 = vmul.f32 %v136, %v440
    %v442 = vmul.f32 %v139, %v440
    %v443 = vmul.f32 %v142, %v440
    %v444 = vmul.f32 %v145, %v440
    %v445 = vmul.f32 %v148, %v440
    %v446 = vmul.f32 %v151, %v440
    %v447 = vmul.f32 %v154, %v440
    %v448 = vmul.f32 %v157, %v440
    %v449 = vmul.f32 %v160, %v440
    %v450 = vmul.f32 %v163, %v440
    %v451 = vmul.f32 %v166, %v440
    %v452 = vmul.f32 %v169, %v440
    %v453 = vmul.f32 %v172, %v440
    %v454 = vmul.f32 %v175, %v440
    %v455 = vmul.f32 %v178, %v440
    %v456 = vmul.f32 %v181, %v440
    %v457 = vstv %s224
    %v458 = vmul.f32 %v183, %v457
    %v459 = vmul.f32 %v184, %v457
    %v460 = vmul.f32 %v185, %v457
    %v461 = vmul.f32 %v186, %v457
    %v462 = vmul.f32 %v187, %v457
    %v463 = vmul.f32 %v188, %v457
    %v464 = vmul.f32 %v189, %v457
    %v465 = vmul.f32 %v190, %v457
    %v466 = vmul.f32 %v191, %v457
    %v467 = vmul.f32 %v192, %v457
    %v468 = vmul.f32 %v193, %v457
    %v469 = vmul.f32 %v194, %v457
    %v470 = vmul.f32 %v195, %v457
    %v471 = vmul.f32 %v196, %v457
    %v472 = vmul.f32 %v197, %v457
    %v473 = vmul.f32 %v198, %v457
    %v474 = vadd.f32 %v441, %v458
    %v475 = vadd.f32 %v442, %v459
    %v476 = vadd.f32 %v443, %v460
    %v477 = vadd.f32 %v444, %v461
    %v478 = vadd.f32 %v445, %v462
    %v479 = vadd.f32 %v446, %v463
    %v480 = vadd.f32 %v447, %v464
    %v481 = vadd.f32 %v448, %v465
    %v482 = vadd.f32 %v449, %v466
    %v483 = vadd.f32 %v450, %v467
    %v484 = vadd.f32 %v451, %v468
    %v485 = vadd.f32 %v452, %v469
    %v486 = vadd.f32 %v453, %v470
    %v487 = vadd.f32 %v454, %v471
    %v488 = vadd.f32 %v455, %v472
    %v489 = vadd.f32 %v456, %v473
    %v490 = vstv %s219
    %v491 = vmul.f32 %v136, %v490
    %v492 = vmul.f32 %v139, %v490
    %v493 = vmul.f32 %v142, %v490
    %v494 = vmul.f32 %v145, %v490
    %v495 = vmul.f32 %v148, %v490
    %v496 = vmul.f32 %v151, %v490
    %v497 = vmul.f32 %v154, %v490
    %v498 = vmul.f32 %v157, %v490
    %v499 = vmul.f32 %v160, %v490
    %v500 = vmul.f32 %v163, %v490
    %v501 = vmul.f32 %v166, %v490
    %v502 = vmul.f32 %v169, %v490
    %v503 = vmul.f32 %v172, %v490
    %v504 = vmul.f32 %v175, %v490
    %v505 = vmul.f32 %v178, %v490
    %v506 = vmul.f32 %v181, %v490
    %523 = vrot.lane.b32.xlu0 %v491, 96
    %v524 = vpop.permute.xlu0 %523
    %525 = vrot.lane.b32.xlu0 %v492, 96
    %v526 = vpop.permute.xlu0 %525
    %527 = vrot.lane.b32.xlu0 %v493, 96
    %v528 = vpop.permute.xlu0 %527
    %529 = vrot.lane.b32.xlu0 %v494, 96
    %v530 = vpop.permute.xlu0 %529
    %531 = vrot.lane.b32.xlu0 %v495, 96
    %v532 = vpop.permute.xlu0 %531
    %533 = vrot.lane.b32.xlu0 %v496, 96
    %v534 = vpop.permute.xlu0 %533
    %535 = vrot.lane.b32.xlu0 %v497, 96
    %v536 = vpop.permute.xlu0 %535
    %537 = vrot.lane.b32.xlu0 %v498, 96
    %v538 = vpop.permute.xlu0 %537
    %539 = vrot.lane.b32.xlu0 %v499, 96
    %v540 = vpop.permute.xlu0 %539
    %541 = vrot.lane.b32.xlu0 %v500, 96
    %v542 = vpop.permute.xlu0 %541
    %543 = vrot.lane.b32.xlu0 %v501, 96
    %v544 = vpop.permute.xlu0 %543
    %545 = vrot.lane.b32.xlu0 %v502, 96
    %v546 = vpop.permute.xlu0 %545
    %547 = vrot.lane.b32.xlu0 %v503, 96
    %v548 = vpop.permute.xlu0 %547
    %549 = vrot.lane.b32.xlu0 %v504, 96
    %v550 = vpop.permute.xlu0 %549
    %551 = vrot.lane.b32.xlu0 %v505, 96
    %v552 = vpop.permute.xlu0 %551
    %553 = vrot.lane.b32.xlu0 %v506, 96
    %v554 = vpop.permute.xlu0 %553
    %v571 = vadd.f32 %v474, %v524
    %v572 = vadd.f32 %v475, %v526
    %v573 = vadd.f32 %v476, %v528
    %v574 = vadd.f32 %v477, %v530
    %v575 = vadd.f32 %v478, %v532
    %v576 = vadd.f32 %v479, %v534
    %v577 = vadd.f32 %v480, %v536
    %v578 = vadd.f32 %v481, %v538
    %v579 = vadd.f32 %v482, %v540
    %v580 = vadd.f32 %v483, %v542
    %v581 = vadd.f32 %v484, %v544
    %v582 = vadd.f32 %v485, %v546
    %v583 = vadd.f32 %v486, %v548
    %v584 = vadd.f32 %v487, %v550
    %v585 = vadd.f32 %v488, %v552
    %v586 = vadd.f32 %v489, %v554
    %v587 = vstv %s225
    %v588 = vmul.f32 %v200, %v587
    %v589 = vmul.f32 %v201, %v587
    %v590 = vmul.f32 %v202, %v587
    %v591 = vmul.f32 %v203, %v587
    %v592 = vmul.f32 %v204, %v587
    %v593 = vmul.f32 %v205, %v587
    %v594 = vmul.f32 %v206, %v587
    %v595 = vmul.f32 %v207, %v587
    %v596 = vmul.f32 %v208, %v587
    %v597 = vmul.f32 %v209, %v587
    %v598 = vmul.f32 %v210, %v587
    %v599 = vmul.f32 %v211, %v587
    %v600 = vmul.f32 %v212, %v587
    %v601 = vmul.f32 %v213, %v587
    %v602 = vmul.f32 %v214, %v587
    %v603 = vmul.f32 %v215, %v587
    %v604 = vadd.f32 %v571, %v588
    %v605 = vadd.f32 %v572, %v589
    %v606 = vadd.f32 %v573, %v590
    %v607 = vadd.f32 %v574, %v591
    %v608 = vadd.f32 %v575, %v592
    %v609 = vadd.f32 %v576, %v593
    %v610 = vadd.f32 %v577, %v594
    %v611 = vadd.f32 %v578, %v595
    %v612 = vadd.f32 %v579, %v596
    %v613 = vadd.f32 %v580, %v597
    %v614 = vadd.f32 %v581, %v598
    %v615 = vadd.f32 %v582, %v599
    %v616 = vadd.f32 %v583, %v600
    %v617 = vadd.f32 %v584, %v601
    %v618 = vadd.f32 %v585, %v602
    %v619 = vadd.f32 %v586, %v603
    %v620 = vld [vmem:[%s1 + $0x4] sm:$0xf]
    %v621 = vld [vmem:[%s1 + $0x10] sm:$0xf]
    %v622 = vld [vmem:[%s1 + $0x1c] sm:$0xf]
    %v623 = vld [vmem:[%s1 + $0x28] sm:$0xf]
    %v624 = vld [vmem:[%s1 + $0x34] sm:$0xf]
    %v625 = vld [vmem:[%s1 + $0x40] sm:$0xf]
    %v626 = vld [vmem:[%s1 + $0x4c] sm:$0xf]
    %v627 = vld [vmem:[%s1 + $0x58] sm:$0xf]
    %v628 = vld [vmem:[%s1 + $0x64] sm:$0xf]
    %v629 = vld [vmem:[%s1 + $0x70] sm:$0xf]
    %v630 = vld [vmem:[%s1 + $0x7c] sm:$0xf]
    %v631 = vld [vmem:[%s1 + $0x88] sm:$0xf]
    %v632 = vld [vmem:[%s1 + $0x94] sm:$0xf]
    %v633 = vld [vmem:[%s1 + $0xa0] sm:$0xf]
    %v634 = vld [vmem:[%s1 + $0xac] sm:$0xf]
    %v635 = vld [vmem:[%s1 + $0xb8] sm:$0xf]
    %v636 = vunpack.c.l.bf16 %v620
    %v637 = vunpack.c.l.bf16 %v621
    %v638 = vunpack.c.l.bf16 %v622
    %v639 = vunpack.c.l.bf16 %v623
    %v640 = vunpack.c.l.bf16 %v624
    %v641 = vunpack.c.l.bf16 %v625
    %v642 = vunpack.c.l.bf16 %v626
    %v643 = vunpack.c.l.bf16 %v627
    %v644 = vunpack.c.l.bf16 %v628
    %v645 = vunpack.c.l.bf16 %v629
    %v646 = vunpack.c.l.bf16 %v630
    %v647 = vunpack.c.l.bf16 %v631
    %v648 = vunpack.c.l.bf16 %v632
    %v649 = vunpack.c.l.bf16 %v633
    %v650 = vunpack.c.l.bf16 %v634
    %v651 = vunpack.c.l.bf16 %v635
    %652 = vmatpush.msra.mxu0 %v619
    %653 = vmatpush.msra.mxu0 %v618
    %654 = vmatpush.msra.mxu0 %v617
    %655 = vmatpush.msra.mxu0 %v616
    %656 = vmatpush.msra.mxu0 %v615
    %657 = vmatpush.msra.mxu0 %v614
    %658 = vmatpush.msra.mxu0 %v613
    %659 = vmatpush.msra.mxu0 %v612
    %660 = vmatpush.msra.mxu0 %v611
    %661 = vmatpush.msra.mxu0 %v610
    %662 = vmatpush.msra.mxu0 %v609
    %663 = vmatpush.msra.mxu0 %v608
    %664 = vmatpush.msra.mxu0 %v607
    %665 = vmatpush.msra.mxu0 %v606
    %666 = vmatpush.msra.mxu0 %v605
    %667 = vmatpush.msra.mxu0 %v604
    %668 = vmatmul.f32.gmra.mxu0 %v636
    %v669 = vpop.f32.mrf.mxu0
    %v670 = vadd.f32 0.0, %v669
    %671 = vmatmul.f32.gmra.mxu0 %v637
    %v672 = vpop.f32.mrf.mxu0
    %v673 = vadd.f32 0.0, %v672
    %674 = vmatmul.f32.gmra.mxu0 %v638
    %v675 = vpop.f32.mrf.mxu0
    %v676 = vadd.f32 0.0, %v675
    %677 = vmatmul.f32.gmra.mxu0 %v639
    %v678 = vpop.f32.mrf.mxu0
    %v679 = vadd.f32 0.0, %v678
    %680 = vmatmul.f32.gmra.mxu0 %v640
    %v681 = vpop.f32.mrf.mxu0
    %v682 = vadd.f32 0.0, %v681
    %683 = vmatmul.f32.gmra.mxu0 %v641
    %v684 = vpop.f32.mrf.mxu0
    %v685 = vadd.f32 0.0, %v684
    %686 = vmatmul.f32.gmra.mxu0 %v642
    %v687 = vpop.f32.mrf.mxu0
    %v688 = vadd.f32 0.0, %v687
    %689 = vmatmul.f32.gmra.mxu0 %v643
    %v690 = vpop.f32.mrf.mxu0
    %v691 = vadd.f32 0.0, %v690
    %692 = vmatmul.f32.gmra.mxu0 %v644
    %v693 = vpop.f32.mrf.mxu0
    %v694 = vadd.f32 0.0, %v693
    %695 = vmatmul.f32.gmra.mxu0 %v645
    %v696 = vpop.f32.mrf.mxu0
    %v697 = vadd.f32 0.0, %v696
    %698 = vmatmul.f32.gmra.mxu0 %v646
    %v699 = vpop.f32.mrf.mxu0
    %v700 = vadd.f32 0.0, %v699
    %701 = vmatmul.f32.gmra.mxu0 %v647
    %v702 = vpop.f32.mrf.mxu0
    %v703 = vadd.f32 0.0, %v702
    %704 = vmatmul.f32.gmra.mxu0 %v648
    %v705 = vpop.f32.mrf.mxu0
    %v706 = vadd.f32 0.0, %v705
    %707 = vmatmul.f32.gmra.mxu0 %v649
    %v708 = vpop.f32.mrf.mxu0
    %v709 = vadd.f32 0.0, %v708
    %710 = vmatmul.f32.gmra.mxu0 %v650
    %v711 = vpop.f32.mrf.mxu0
    %v712 = vadd.f32 0.0, %v711
    %713 = vmatmul.f32.gmra.mxu0 %v651
    %v714 = vpop.f32.mrf.mxu0
    %v715 = vadd.f32 0.0, %v714
    %716 = vdwg.mxu0
    %717 = vmatpush.msra.mxu0 %v407
    %718 = vmatpush.msra.mxu0 %v406
    %719 = vmatpush.msra.mxu0 %v405
    %720 = vmatpush.msra.mxu0 %v404
    %721 = vmatpush.msra.mxu0 %v403
    %722 = vmatpush.msra.mxu0 %v402
    %723 = vmatpush.msra.mxu0 %v401
    %724 = vmatpush.msra.mxu0 %v400
    %725 = vmatpush.msra.mxu0 %v399
    %726 = vmatpush.msra.mxu0 %v398
    %727 = vmatpush.msra.mxu0 %v397
    %728 = vmatpush.msra.mxu0 %v396
    %729 = vmatpush.msra.mxu0 %v395
    %730 = vmatpush.msra.mxu0 %v394
    %731 = vmatpush.msra.mxu0 %v393
    %732 = vmatpush.msra.mxu0 %v392
    %733 = vmatmul.f32.gmra.mxu0 %v424
    %v734 = vpop.f32.mrf.mxu0
    %v735 = vadd.f32 %v670, %v734
    %736 = vmatmul.f32.gmra.mxu0 %v425
    %v737 = vpop.f32.mrf.mxu0
    %v738 = vadd.f32 %v673, %v737
    %739 = vmatmul.f32.gmra.mxu0 %v426
    %v740 = vpop.f32.mrf.mxu0
    %v741 = vadd.f32 %v676, %v740
    %742 = vmatmul.f32.gmra.mxu0 %v427
    %v743 = vpop.f32.mrf.mxu0
    %v744 = vadd.f32 %v679, %v743
    %745 = vmatmul.f32.gmra.mxu0 %v428
    %v746 = vpop.f32.mrf.mxu0
    %v747 = vadd.f32 %v682, %v746
    %748 = vmatmul.f32.gmra.mxu0 %v429
    %v749 = vpop.f32.mrf.mxu0
    %v750 = vadd.f32 %v685, %v749
    %751 = vmatmul.f32.gmra.mxu0 %v430
    %v752 = vpop.f32.mrf.mxu0
    %v753 = vadd.f32 %v688, %v752
    %754 = vmatmul.f32.gmra.mxu0 %v431
    %v755 = vpop.f32.mrf.mxu0
    %v756 = vadd.f32 %v691, %v755
    %757 = vmatmul.f32.gmra.mxu0 %v432
    %v758 = vpop.f32.mrf.mxu0
    %v759 = vadd.f32 %v694, %v758
    %760 = vmatmul.f32.gmra.mxu0 %v433
    %v761 = vpop.f32.mrf.mxu0
    %v762 = vadd.f32 %v697, %v761
    %763 = vmatmul.f32.gmra.mxu0 %v434
    %v764 = vpop.f32.mrf.mxu0
    %v765 = vadd.f32 %v700, %v764
    %766 = vmatmul.f32.gmra.mxu0 %v435
    %v767 = vpop.f32.mrf.mxu0
    %v768 = vadd.f32 %v703, %v767
    %769 = vmatmul.f32.gmra.mxu0 %v436
    %v770 = vpop.f32.mrf.mxu0
    %v771 = vadd.f32 %v706, %v770
    %772 = vmatmul.f32.gmra.mxu0 %v437
    %v773 = vpop.f32.mrf.mxu0
    %v774 = vadd.f32 %v709, %v773
    %775 = vmatmul.f32.gmra.mxu0 %v438
    %v776 = vpop.f32.mrf.mxu0
    %v777 = vadd.f32 %v712, %v776
    %778 = vmatmul.f32.gmra.mxu0 %v439
    %v779 = vpop.f32.mrf.mxu0
    %v780 = vadd.f32 %v715, %v779
    %781 = vdwg.mxu0
    %v782 = vstv %s220
    %v783 = vmul.f32 %v136, %v782
    %v784 = vmul.f32 %v139, %v782
    %v785 = vmul.f32 %v142, %v782
    %v786 = vmul.f32 %v145, %v782
    %v787 = vmul.f32 %v148, %v782
    %v788 = vmul.f32 %v151, %v782
    %v789 = vmul.f32 %v154, %v782
    %v790 = vmul.f32 %v157, %v782
    %v791 = vmul.f32 %v160, %v782
    %v792 = vmul.f32 %v163, %v782
    %v793 = vmul.f32 %v166, %v782
    %v794 = vmul.f32 %v169, %v782
    %v795 = vmul.f32 %v172, %v782
    %v796 = vmul.f32 %v175, %v782
    %v797 = vmul.f32 %v178, %v782
    %v798 = vmul.f32 %v181, %v782
    %v799 = vstv %s226
    %v800 = vmul.f32 %v183, %v799
    %v801 = vmul.f32 %v184, %v799
    %v802 = vmul.f32 %v185, %v799
    %v803 = vmul.f32 %v186, %v799
    %v804 = vmul.f32 %v187, %v799
    %v805 = vmul.f32 %v188, %v799
    %v806 = vmul.f32 %v189, %v799
    %v807 = vmul.f32 %v190, %v799
    %v808 = vmul.f32 %v191, %v799
    %v809 = vmul.f32 %v192, %v799
    %v810 = vmul.f32 %v193, %v799
    %v811 = vmul.f32 %v194, %v799
    %v812 = vmul.f32 %v195, %v799
    %v813 = vmul.f32 %v196, %v799
    %v814 = vmul.f32 %v197, %v799
    %v815 = vmul.f32 %v198, %v799
    %v816 = vadd.f32 %v783, %v800
    %v817 = vadd.f32 %v784, %v801
    %v818 = vadd.f32 %v785, %v802
    %v819 = vadd.f32 %v786, %v803
    %v820 = vadd.f32 %v787, %v804
    %v821 = vadd.f32 %v788, %v805
    %v822 = vadd.f32 %v789, %v806
    %v823 = vadd.f32 %v790, %v807
    %v824 = vadd.f32 %v791, %v808
    %v825 = vadd.f32 %v792, %v809
    %v826 = vadd.f32 %v793, %v810
    %v827 = vadd.f32 %v794, %v811
    %v828 = vadd.f32 %v795, %v812
    %v829 = vadd.f32 %v796, %v813
    %v830 = vadd.f32 %v797, %v814
    %v831 = vadd.f32 %v798, %v815
    %v832 = vstv %s221
    %v833 = vmul.f32 %v136, %v832
    %v834 = vmul.f32 %v139, %v832
    %v835 = vmul.f32 %v142, %v832
    %v836 = vmul.f32 %v145, %v832
    %v837 = vmul.f32 %v148, %v832
    %v838 = vmul.f32 %v151, %v832
    %v839 = vmul.f32 %v154, %v832
    %v840 = vmul.f32 %v157, %v832
    %v841 = vmul.f32 %v160, %v832
    %v842 = vmul.f32 %v163, %v832
    %v843 = vmul.f32 %v166, %v832
    %v844 = vmul.f32 %v169, %v832
    %v845 = vmul.f32 %v172, %v832
    %v846 = vmul.f32 %v175, %v832
    %v847 = vmul.f32 %v178, %v832
    %v848 = vmul.f32 %v181, %v832
    %865 = vrot.lane.b32.xlu0 %v833, 96
    %v866 = vpop.permute.xlu0 %865
    %867 = vrot.lane.b32.xlu0 %v834, 96
    %v868 = vpop.permute.xlu0 %867
    %869 = vrot.lane.b32.xlu0 %v835, 96
    %v870 = vpop.permute.xlu0 %869
    %871 = vrot.lane.b32.xlu0 %v836, 96
    %v872 = vpop.permute.xlu0 %871
    %873 = vrot.lane.b32.xlu0 %v837, 96
    %v874 = vpop.permute.xlu0 %873
    %875 = vrot.lane.b32.xlu0 %v838, 96
    %v876 = vpop.permute.xlu0 %875
    %877 = vrot.lane.b32.xlu0 %v839, 96
    %v878 = vpop.permute.xlu0 %877
    %879 = vrot.lane.b32.xlu0 %v840, 96
    %v880 = vpop.permute.xlu0 %879
    %881 = vrot.lane.b32.xlu0 %v841, 96
    %v882 = vpop.permute.xlu0 %881
    %883 = vrot.lane.b32.xlu0 %v842, 96
    %v884 = vpop.permute.xlu0 %883
    %885 = vrot.lane.b32.xlu0 %v843, 96
    %v886 = vpop.permute.xlu0 %885
    %887 = vrot.lane.b32.xlu0 %v844, 96
    %v888 = vpop.permute.xlu0 %887
    %889 = vrot.lane.b32.xlu0 %v845, 96
    %v890 = vpop.permute.xlu0 %889
    %891 = vrot.lane.b32.xlu0 %v846, 96
    %v892 = vpop.permute.xlu0 %891
    %893 = vrot.lane.b32.xlu0 %v847, 96
    %v894 = vpop.permute.xlu0 %893
    %895 = vrot.lane.b32.xlu0 %v848, 96
    %v896 = vpop.permute.xlu0 %895
    %v913 = vadd.f32 %v816, %v866
    %v914 = vadd.f32 %v817, %v868
    %v915 = vadd.f32 %v818, %v870
    %v916 = vadd.f32 %v819, %v872
    %v917 = vadd.f32 %v820, %v874
    %v918 = vadd.f32 %v821, %v876
    %v919 = vadd.f32 %v822, %v878
    %v920 = vadd.f32 %v823, %v880
    %v921 = vadd.f32 %v824, %v882
    %v922 = vadd.f32 %v825, %v884
    %v923 = vadd.f32 %v826, %v886
    %v924 = vadd.f32 %v827, %v888
    %v925 = vadd.f32 %v828, %v890
    %v926 = vadd.f32 %v829, %v892
    %v927 = vadd.f32 %v830, %v894
    %v928 = vadd.f32 %v831, %v896
    %v929 = vstv %s227
    %v930 = vmul.f32 %v200, %v929
    %v931 = vmul.f32 %v201, %v929
    %v932 = vmul.f32 %v202, %v929
    %v933 = vmul.f32 %v203, %v929
    %v934 = vmul.f32 %v204, %v929
    %v935 = vmul.f32 %v205, %v929
    %v936 = vmul.f32 %v206, %v929
    %v937 = vmul.f32 %v207, %v929
    %v938 = vmul.f32 %v208, %v929
    %v939 = vmul.f32 %v209, %v929
    %v940 = vmul.f32 %v210, %v929
    %v941 = vmul.f32 %v211, %v929
    %v942 = vmul.f32 %v212, %v929
    %v943 = vmul.f32 %v213, %v929
    %v944 = vmul.f32 %v214, %v929
    %v945 = vmul.f32 %v215, %v929
    %v946 = vadd.f32 %v913, %v930
    %v947 = vadd.f32 %v914, %v931
    %v948 = vadd.f32 %v915, %v932
    %v949 = vadd.f32 %v916, %v933
    %v950 = vadd.f32 %v917, %v934
    %v951 = vadd.f32 %v918, %v935
    %v952 = vadd.f32 %v919, %v936
    %v953 = vadd.f32 %v920, %v937
    %v954 = vadd.f32 %v921, %v938
    %v955 = vadd.f32 %v922, %v939
    %v956 = vadd.f32 %v923, %v940
    %v957 = vadd.f32 %v924, %v941
    %v958 = vadd.f32 %v925, %v942
    %v959 = vadd.f32 %v926, %v943
    %v960 = vadd.f32 %v927, %v944
    %v961 = vadd.f32 %v928, %v945
    %v962 = vld [vmem:[%s1 + $0x8] sm:$0xf]
    %v963 = vld [vmem:[%s1 + $0x14] sm:$0xf]
    %v964 = vld [vmem:[%s1 + $0x20] sm:$0xf]
    %v965 = vld [vmem:[%s1 + $0x2c] sm:$0xf]
    %v966 = vld [vmem:[%s1 + $0x38] sm:$0xf]
    %v967 = vld [vmem:[%s1 + $0x44] sm:$0xf]
    %v968 = vld [vmem:[%s1 + $0x50] sm:$0xf]
    %v969 = vld [vmem:[%s1 + $0x5c] sm:$0xf]
    %v970 = vld [vmem:[%s1 + $0x68] sm:$0xf]
    %v971 = vld [vmem:[%s1 + $0x74] sm:$0xf]
    %v972 = vld [vmem:[%s1 + $0x80] sm:$0xf]
    %v973 = vld [vmem:[%s1 + $0x8c] sm:$0xf]
    %v974 = vld [vmem:[%s1 + $0x98] sm:$0xf]
    %v975 = vld [vmem:[%s1 + $0xa4] sm:$0xf]
    %v976 = vld [vmem:[%s1 + $0xb0] sm:$0xf]
    %v977 = vld [vmem:[%s1 + $0xbc] sm:$0xf]
    %v978 = vunpack.c.l.bf16 %v962
    %v979 = vunpack.c.l.bf16 %v963
    %v980 = vunpack.c.l.bf16 %v964
    %v981 = vunpack.c.l.bf16 %v965
    %v982 = vunpack.c.l.bf16 %v966
    %v983 = vunpack.c.l.bf16 %v967
    %v984 = vunpack.c.l.bf16 %v968
    %v985 = vunpack.c.l.bf16 %v969
    %v986 = vunpack.c.l.bf16 %v970
    %v987 = vunpack.c.l.bf16 %v971
    %v988 = vunpack.c.l.bf16 %v972
    %v989 = vunpack.c.l.bf16 %v973
    %v990 = vunpack.c.l.bf16 %v974
    %v991 = vunpack.c.l.bf16 %v975
    %v992 = vunpack.c.l.bf16 %v976
    %v993 = vunpack.c.l.bf16 %v977
    %994 = vmatpush.msra.mxu0 %v961
    %995 = vmatpush.msra.mxu0 %v960
    %996 = vmatpush.msra.mxu0 %v959
    %997 = vmatpush.msra.mxu0 %v958
    %998 = vmatpush.msra.mxu0 %v957
    %999 = vmatpush.msra.mxu0 %v956
    %1000 = vmatpush.msra.mxu0 %v955
    %1001 = vmatpush.msra.mxu0 %v954
    %1002 = vmatpush.msra.mxu0 %v953
    %1003 = vmatpush.msra.mxu0 %v952
    %1004 = vmatpush.msra.mxu0 %v951
    %1005 = vmatpush.msra.mxu0 %v950
    %1006 = vmatpush.msra.mxu0 %v949
    %1007 = vmatpush.msra.mxu0 %v948
    %1008 = vmatpush.msra.mxu0 %v947
    %1009 = vmatpush.msra.mxu0 %v946
    %1010 = vmatmul.f32.gmra.mxu0 %v978
    %v1011 = vpop.f32.mrf.mxu0
    %v1012 = vadd.f32 0.0, %v1011
    %1013 = vmatmul.f32.gmra.mxu0 %v979
    %v1014 = vpop.f32.mrf.mxu0
    %v1015 = vadd.f32 0.0, %v1014
    %1016 = vmatmul.f32.gmra.mxu0 %v980
    %v1017 = vpop.f32.mrf.mxu0
    %v1018 = vadd.f32 0.0, %v1017
    %1019 = vmatmul.f32.gmra.mxu0 %v981
    %v1020 = vpop.f32.mrf.mxu0
    %v1021 = vadd.f32 0.0, %v1020
    %1022 = vmatmul.f32.gmra.mxu0 %v982
    %v1023 = vpop.f32.mrf.mxu0
    %v1024 = vadd.f32 0.0, %v1023
    %1025 = vmatmul.f32.gmra.mxu0 %v983
    %v1026 = vpop.f32.mrf.mxu0
    %v1027 = vadd.f32 0.0, %v1026
    %1028 = vmatmul.f32.gmra.mxu0 %v984
    %v1029 = vpop.f32.mrf.mxu0
    %v1030 = vadd.f32 0.0, %v1029
    %1031 = vmatmul.f32.gmra.mxu0 %v985
    %v1032 = vpop.f32.mrf.mxu0
    %v1033 = vadd.f32 0.0, %v1032
    %1034 = vmatmul.f32.gmra.mxu0 %v986
    %v1035 = vpop.f32.mrf.mxu0
    %v1036 = vadd.f32 0.0, %v1035
    %1037 = vmatmul.f32.gmra.mxu0 %v987
    %v1038 = vpop.f32.mrf.mxu0
    %v1039 = vadd.f32 0.0, %v1038
    %1040 = vmatmul.f32.gmra.mxu0 %v988
    %v1041 = vpop.f32.mrf.mxu0
    %v1042 = vadd.f32 0.0, %v1041
    %1043 = vmatmul.f32.gmra.mxu0 %v989
    %v1044 = vpop.f32.mrf.mxu0
    %v1045 = vadd.f32 0.0, %v1044
    %1046 = vmatmul.f32.gmra.mxu0 %v990
    %v1047 = vpop.f32.mrf.mxu0
    %v1048 = vadd.f32 0.0, %v1047
    %1049 = vmatmul.f32.gmra.mxu0 %v991
    %v1050 = vpop.f32.mrf.mxu0
    %v1051 = vadd.f32 0.0, %v1050
    %1052 = vmatmul.f32.gmra.mxu0 %v992
    %v1053 = vpop.f32.mrf.mxu0
    %v1054 = vadd.f32 0.0, %v1053
    %1055 = vmatmul.f32.gmra.mxu0 %v993
    %v1056 = vpop.f32.mrf.mxu0
    %v1057 = vadd.f32 0.0, %v1056
    %1058 = vdwg.mxu0
    %v1059 = vadd.f32 %v735, %v1012
    %v1060 = vadd.f32 %v738, %v1015
    %v1061 = vadd.f32 %v741, %v1018
    %v1062 = vadd.f32 %v744, %v1021
    %v1063 = vadd.f32 %v747, %v1024
    %v1064 = vadd.f32 %v750, %v1027
    %v1065 = vadd.f32 %v753, %v1030
    %v1066 = vadd.f32 %v756, %v1033
    %v1067 = vadd.f32 %v759, %v1036
    %v1068 = vadd.f32 %v762, %v1039
    %v1069 = vadd.f32 %v765, %v1042
    %v1070 = vadd.f32 %v768, %v1045
    %v1071 = vadd.f32 %v771, %v1048
    %v1072 = vadd.f32 %v774, %v1051
    %v1073 = vadd.f32 %v777, %v1054
    %v1074 = vadd.f32 %v780, %v1057
    %v1075 = vld [vmem:[%s6] sm:$0x1]
    %v1077 = vperm.slane %v1075, 0
    %v1079 = vadd.f32 %v1059, %v1077
    %v1080 = vadd.f32 %v1060, %v1077
    %v1081 = vadd.f32 %v1061, %v1077
    %v1082 = vadd.f32 %v1062, %v1077
    %v1083 = vadd.f32 %v1063, %v1077
    %v1084 = vadd.f32 %v1064, %v1077
    %v1085 = vadd.f32 %v1065, %v1077
    %v1086 = vadd.f32 %v1066, %v1077
    %v1087 = vadd.f32 %v1067, %v1077
    %v1088 = vadd.f32 %v1068, %v1077
    %v1089 = vadd.f32 %v1069, %v1077
    %v1090 = vadd.f32 %v1070, %v1077
    %v1091 = vadd.f32 %v1071, %v1077
    %v1092 = vadd.f32 %v1072, %v1077
    %v1093 = vadd.f32 %v1073, %v1077
    %v1094 = vadd.f32 %v1074, %v1077
    %vm1095 = vcmask 261120
    %1096 = vst.msk [vmem:[%s7] sm:$0xff] %vm1095, %v1079
    %1097 = vst.msk [vmem:[%s7 + $0x8] sm:$0xff] %vm1095, %v1080
    %1098 = vst.msk [vmem:[%s7 + $0x10] sm:$0xff] %vm1095, %v1081
    %1099 = vst.msk [vmem:[%s7 + $0x18] sm:$0xff] %vm1095, %v1082
    %1100 = vst.msk [vmem:[%s7 + $0x20] sm:$0xff] %vm1095, %v1083
    %1101 = vst.msk [vmem:[%s7 + $0x28] sm:$0xff] %vm1095, %v1084
    %1102 = vst.msk [vmem:[%s7 + $0x30] sm:$0xff] %vm1095, %v1085
    %1103 = vst.msk [vmem:[%s7 + $0x38] sm:$0xff] %vm1095, %v1086
    %1104 = vst.msk [vmem:[%s7 + $0x40] sm:$0xff] %vm1095, %v1087
    %1105 = vst.msk [vmem:[%s7 + $0x48] sm:$0xff] %vm1095, %v1088
    %1106 = vst.msk [vmem:[%s7 + $0x50] sm:$0xff] %vm1095, %v1089
    %1107 = vst.msk [vmem:[%s7 + $0x58] sm:$0xff] %vm1095, %v1090
    %1108 = vst.msk [vmem:[%s7 + $0x60] sm:$0xff] %vm1095, %v1091
    %1109 = vst.msk [vmem:[%s7 + $0x68] sm:$0xff] %vm1095, %v1092
    %1110 = vst.msk [vmem:[%s7 + $0x70] sm:$0xff] %vm1095, %v1093
    %1111 = vst.msk [vmem:[%s7 + $0x78] sm:$0xff] %vm1095, %v1094
    // Predicated region
    $region38: #{tpu_custom_call.1} parent=1 // pred_check
      _
    $region39: #{tpu_custom_call.1} parent=1 // pred_check_branch
      %1113 = sbr.rel (0) target = $region41
    $region40: #{tpu_custom_call.1} parent=1 // pred_region
      _
    $region41: #{tpu_custom_call.1} parent=1 // pred_fallthru
      _
    // Predicated region
    $region42: #{tpu_custom_call.1} parent=1 // pred_check
      _
    $region43: #{tpu_custom_call.1} parent=1 // pred_check_branch
      %1115 = sbr.rel (0) target = $region45
    $region44: #{tpu_custom_call.1} parent=1 // pred_region
      _
    $region45: #{tpu_custom_call.1} parent=1 // pred_fallthru
      _
    %1116 = vsyncpa [#allocation3], 1
    %1117 = vsyncpa [#allocation5], 1

</llo_original>
